<compile_context>
chip_gen: v6e
topology: v6e:2x2x1
jax: 0.10.0
libtpu: 0.0.40
codegen_flags: <defaults>
</compile_context>

<pallas_src>
import functools

import numpy as np
import jax
import jax.numpy as jnp
from jax.experimental import pallas as pl
from jax.experimental.pallas import tpu as pltpu


def _nt_xent_kernel(inv_temp, n_valid, k, use_bf16_exp,
                    zn_rows_ref, znT_ref, out_ref):
    """One row-tile of the NT-Xent loss.

    zn_rows_ref: (TM, Dp) bf16 -- this tile's rows of the L2-normalized z.
    znT_ref:     (Dp, Np) bf16 -- full normalized z, pre-transposed (resident).
    out_ref:     (1, TM) f32   -- per-row (logsumexp(logits_r) - positive_r),
                                  zero for padded tail rows.
    """
    tm = out_ref.shape[1]
    np_cols = znT_ref.shape[1]
    row0 = pl.program_id(0) * tm

    # --- similarity tile (operands are already unit vectors) ------------------
    sim = jax.lax.dot_general(
        zn_rows_ref[...], znT_ref[...],
        dimension_numbers=(((1,), (0,)), ((), ())),
        preferred_element_type=jnp.float32)                        # (TM, Np)
    sim = sim * inv_temp                                           # one VPU mul

    # --- masks from iota (no dense constant inputs, minimal temporaries) ------
    row = row0 + jax.lax.broadcasted_iota(jnp.int32, (tm, 1), 0)   # (TM, 1)
    partner = jnp.where(row < k, row + k, row - k)                 # (TM, 1)
    col = jax.lax.broadcasted_iota(jnp.int32, (tm, np_cols), 1)    # (TM, Np)
    is_pos = col == partner
    is_neg = (col != row) & jnp.logical_not(is_pos) & (col < n_valid)

    # positive[r] = sim[r, partner(r)]  (== torch.diag(sim, K) duplicated,
    # since the cosine-similarity matrix is symmetric).
    positive = jnp.sum(jnp.where(is_pos, sim, 0.0), axis=-1, keepdims=True)

    # CrossEntropyLoss(reduction='sum') with label 0 on [positive | negatives]:
    #   per-row term = logsumexp(logits_r) - positive_r
    masked = jnp.where(is_neg, sim, -1e30)                         # (TM, Np)
    m = jnp.maximum(jnp.max(masked, axis=-1, keepdims=True), positive)
    shifted = masked - m       # masked-out entries stay ~-1e30 -> exp == 0
    if use_bf16_exp:
        # bf16 shares f32's exponent range, so the -1e30 fill still underflows
        # exp() to exactly 0; row sums accumulate in f32.
        exp_terms = jnp.exp(shifted.astype(jnp.bfloat16)).astype(jnp.float32)
    else:
        exp_terms = jnp.exp(shifted)
    sum_exp = (jnp.sum(exp_terms, axis=-1, keepdims=True)
               + jnp.exp(positive - m))                            # (TM, 1)
    per_row = (m + jnp.log(sum_exp)) - positive                    # (TM, 1)

    # Zero padded tail rows and store lane-dense as a (1, TM) row.
    per_row = jnp.where(row < n_valid, per_row, 0.0)
    out_ref[...] = per_row.reshape(1, tm)


def _round_up(x, m):
    return ((x + m - 1) // m) * m


def _tpu_vmem_capacity_bytes():
    try:
        info = pltpu.get_tpu_info()
        return int(info.vmem_capacity_bytes)
    except Exception:
        return None


def _chip_has_bf16_eup():
    # v6e / v7x (and later) have a bf16 EUP path; v5e and older do not.
    try:
        kind = jax.devices()[0].device_kind.lower()
    except Exception:
        return False
    if "tpu" not in kind:
        return False
    for old in ("v2", "v3", "v4", "v5"):
        if old in kind:
            return False
    return True


class CalContrastiveLossPallas:
    def __init__(self, batch_size, temperature, word_size=1):
        assert word_size == 1, \
            "word_size > 1 requires dist.all_gather (GatherLayer) — not implemented"
        self.batch_size = batch_size
        self.temperature = float(temperature)
        self.word_size = word_size
        self.N = 2 * batch_size * word_size

        vmem_cap = _tpu_vmem_capacity_bytes()
        # Row tile: 256 on 128-MiB-VMEM chips (v5e/v6e), 128 on v7x (64 MiB)
        # and when the capacity can't be queried.
        if vmem_cap is not None and vmem_cap > (64 << 20):
            self.tm = 256
        else:
            self.tm = 128
        self.vmem_cap = vmem_cap if vmem_cap is not None else (64 << 20)
        self.use_bf16_exp = _chip_has_bf16_eup()

    def __call__(self, z_i, z_j):
        # torch.squeeze on (B, 1, D); squeeze only the singleton channel axis
        # so batch_size == 1 would keep a 2-D layout.
        z_i = jnp.squeeze(z_i, axis=1)
        z_j = jnp.squeeze(z_j, axis=1)
        z = jnp.concatenate([z_i, z_j], axis=0).astype(jnp.float32)   # (N, D)
        n, d = z.shape
        assert n == self.N
        k = n // 2

        # L2-normalize ONCE in plain XLA, then cast to bf16 MXU operands.
        # (torch.nn.CosineSimilarity clamps the *product* of norms at eps;
        #  clamping each norm is only divergent for near-zero vectors.)
        eps = 1e-8
        inv_norm = jax.lax.rsqrt(
            jnp.maximum(jnp.sum(z * z, axis=-1, keepdims=True), eps * eps))
        zn = z * inv_norm

        tm = self.tm
        num_tiles = pl.cdiv(n, tm)
        np_rows = num_tiles * tm                  # padded row/col count
        dp = _round_up(d, 128)                    # padded feature dim (lanes)

        # Zero padding changes neither norms nor dot products; padded rows/cols
        # are masked in-kernel.
        zn_p = jnp.pad(zn, ((0, np_rows - n), (0, dp - d)))
        zn_bf = zn_p.astype(jnp.bfloat16)         # (Np, Dp) row operand
        znT_bf = zn_bf.T                          # (Dp, Np) resident col operand

        # Per-step VMEM: resident znT (2x buffering headroom) + double-buffered
        # row tile + (TM, Np) f32 temporaries + margin.
        est = (2 * np_rows * dp * 2
               + 2 * tm * dp * 2
               + 2 * tm * 4
               + 8 * tm * np_rows * 4
               + (4 << 20))
        vmem_limit = int(max(32 << 20, min(est, self.vmem_cap - (8 << 20))))

        kernel = functools.partial(
            _nt_xent_kernel,
            1.0 / self.temperature,    # Python float (no captured jax arrays)
            int(n),
            int(k),
            bool(self.use_bf16_exp),
        )

        per_row = pl.pallas_call(
            kernel,
            out_shape=jax.ShapeDtypeStruct((1, np_rows), jnp.float32),
            grid=(num_tiles,),
            in_specs=[
                pl.BlockSpec((tm, dp), lambda i: (i, 0)),        # row tile
                pl.BlockSpec((dp, np_rows), lambda i: (0, 0)),   # resident, pre-T
            ],
            out_specs=pl.BlockSpec((1, tm), lambda i: (0, i)),   # lane-dense
            compiler_params=pltpu.CompilerParams(
                dimension_semantics=("parallel",),
                vmem_limit_bytes=vmem_limit),
        )(zn_bf, znT_bf)

        # Tiny final reduction outside the kernel (keeps the grid axis parallel).
        return jnp.sum(per_row) / n


# ------------------------------- correctness ---------------------------------

def _mask_correlated_samples(batch_size, word_size):
    # Faithful reproduction of the PyTorch mask construction.
    N = 2 * batch_size * word_size
    mask = np.ones((N, N), dtype=bool)
    np.fill_diagonal(mask, False)
    for i in range(batch_size * word_size):
        mask[i, batch_size + i] = False
        mask[batch_size + i, i] = False
    return mask


def _reference_loss(z_i, z_j, batch_size, temperature, word_size):
    # Pure-JAX reference mirroring the PyTorch forward.
    z_i = jnp.squeeze(z_i, axis=1)
    z_j = jnp.squeeze(z_j, axis=1)
    N = 2 * batch_size * word_size
    K = batch_size * word_size
    mask_bool = _mask_correlated_samples(batch_size, word_size)
    z = jnp.concatenate([z_i, z_j], axis=0).astype(jnp.float32)
    norm = jnp.linalg.norm(z, axis=-1)
    gram = jnp.einsum("id,jd->ij", z, z, precision="highest")
    sim = gram / jnp.maximum(norm[:, None] * norm[None, :], 1e-8) / temperature
    sim_ij = jnp.diagonal(sim, offset=K)
    positive = jnp.concatenate([sim_ij, sim_ij], axis=0).reshape(N, 1)
    negatives = sim[mask_bool].reshape(N, -1)
    logits = jnp.concatenate([positive, negatives], axis=-1)
    lse = jax.scipy.special.logsumexp(logits, axis=-1)
    return jnp.sum(lse - logits[:, 0]) / N


if __name__ == "__main__":
    batch_size = 8
    temperature = 0.5
    word_size = 1
    feat_dim = 32

    key = jax.random.PRNGKey(0)
    k1, k2 = jax.random.split(key)
    z_i = jax.random.normal(k1, (batch_size, 1, feat_dim), dtype=jnp.float32)
    z_j = jax.random.normal(k2, (batch_size, 1, feat_dim), dtype=jnp.float32)

    loss_mod = CalContrastiveLossPallas(batch_size, temperature, word_size)
    loss = loss_mod(z_i, z_j)
    loss = jax.block_until_ready(loss)

    ref = _reference_loss(z_i, z_j, batch_size, temperature, word_size)
    # Tolerance accounts for bf16 MXU operands (f32 accumulation) in the gram.
    np.testing.assert_allclose(np.asarray(loss), np.asarray(ref),
                               rtol=1e-2, atol=1e-2)

    print("KERNEL_OK")
</pallas_src>

<mosaic_0001>
module attributes {stable_mosaic.version = 11 : i64} {
  func.func @_nt_xent_kernel(%arg0: i32, %arg1: memref<128x128xbf16, #tpu.memory_space<vmem>>, %arg2: memref<128x128xbf16, #tpu.memory_space<vmem>>, %arg3: memref<1x128xf32, #tpu.memory_space<vmem>>) attributes {dimension_semantics = [#tpu.dimension_semantics<parallel>], iteration_bounds = array<i64: 1>, scalar_prefetch = 0 : i64, scratch_operands = 0 : i64, tpu.core_type = #tpu.core_type<tc>, window_params = [{transform_indices = @transform_0, window_bounds = array<i64: 128, 128>}, {pipeline_mode = #tpu.pipeline_mode<synchronous>, transform_indices = @transform_1, window_bounds = array<i64: 128, 128>}, {transform_indices = @transform_2, window_bounds = array<i64: 1, 128>}]} {
    %c128_i32 = arith.constant 128 : i32
    %0 = arith.muli %arg0, %c128_i32 : i32
    %c0 = arith.constant 0 : index
    %c0_0 = arith.constant 0 : index
    %1 = vector.load %arg1[%c0, %c0_0] : memref<128x128xbf16, #tpu.memory_space<vmem>>, vector<128x128xbf16>
    %c0_1 = arith.constant 0 : index
    %c0_2 = arith.constant 0 : index
    %2 = vector.load %arg2[%c0_1, %c0_2] : memref<128x128xbf16, #tpu.memory_space<vmem>>, vector<128x128xbf16>
    %cst = arith.constant dense<0.000000e+00> : vector<128x128xf32>
    %3 = tpu.matmul %1, %2, %cst {dimension_numbers = #tpu.dot_dimension_numbers<[1], [0], [0], [1], [0, 0, 1, 1], [], []>} : vector<128x128xbf16>, vector<128x128xbf16>, vector<128x128xf32> -> vector<128x128xf32>
    %cst_3 = arith.constant 2.000000e+00 : f32
    %4 = vector.broadcast %cst_3 : f32 to vector<128x128xf32>
    %5 = arith.mulf %3, %4 : vector<128x128xf32>
    %6 = tpu.iota {dimensions = array<i32: 0>} : vector<128x1xi32>
    %7 = vector.broadcast %0 : i32 to vector<128x1xi32>
    %8 = arith.addi %7, %6 : vector<128x1xi32>
    %c8_i32 = arith.constant 8 : i32
    %9 = vector.broadcast %c8_i32 : i32 to vector<128x1xi32>
    %10 = arith.cmpi slt, %8, %9 : vector<128x1xi32>
    %c8_i32_4 = arith.constant 8 : i32
    %11 = vector.broadcast %c8_i32_4 : i32 to vector<128x1xi32>
    %12 = arith.addi %8, %11 : vector<128x1xi32>
    %c8_i32_5 = arith.constant 8 : i32
    %13 = vector.broadcast %c8_i32_5 : i32 to vector<128x1xi32>
    %14 = arith.subi %8, %13 : vector<128x1xi32>
    %15 = arith.select %10, %12, %14 : vector<128x1xi1>, vector<128x1xi32>
    %16 = tpu.iota {dimensions = array<i32: 1>} : vector<128x128xi32>
    %17 = vector.broadcast %15 : vector<128x1xi32> to vector<128x128xi32>
    %18 = arith.cmpi eq, %16, %17 : vector<128x128xi32>
    %19 = vector.broadcast %8 : vector<128x1xi32> to vector<128x128xi32>
    %20 = arith.cmpi ne, %16, %19 : vector<128x128xi32>
    %cst_6 = arith.constant dense<true> : vector<128x128xi1>
    %21 = arith.xori %18, %cst_6 : vector<128x128xi1>
    %22 = arith.andi %20, %21 : vector<128x128xi1>
    %c16_i32 = arith.constant 16 : i32
    %23 = vector.broadcast %c16_i32 : i32 to vector<128x128xi32>
    %24 = arith.cmpi slt, %16, %23 : vector<128x128xi32>
    %25 = arith.andi %22, %24 : vector<128x128xi1>
    %cst_7 = arith.constant 0.000000e+00 : f32
    %26 = vector.broadcast %cst_7 : f32 to vector<128x128xf32>
    %27 = arith.select %18, %5, %26 : vector<128x128xi1>, vector<128x128xf32>
    %cst_8 = arith.constant dense<0.000000e+00> : vector<128xf32>
    %28 = vector.multi_reduction <add>, %27, %cst_8 [1] : vector<128x128xf32> to vector<128xf32>
    %29 = vector.shape_cast %28 : vector<128xf32> to vector<128x1xf32>
    %cst_9 = arith.constant -1.000000e+30 : f32
    %30 = vector.broadcast %cst_9 : f32 to vector<128x128xf32>
    %31 = arith.select %25, %5, %30 : vector<128x128xi1>, vector<128x128xf32>
    %cst_10 = arith.constant dense<0xFF800000> : vector<128xf32>
    %32 = vector.multi_reduction <maximumf>, %31, %cst_10 [1] : vector<128x128xf32> to vector<128xf32>
    %33 = vector.shape_cast %32 : vector<128xf32> to vector<128x1xf32>
    %34 = arith.maximumf %33, %29 : vector<128x1xf32>
    %35 = vector.broadcast %34 : vector<128x1xf32> to vector<128x128xf32>
    %36 = arith.subf %31, %35 : vector<128x128xf32>
    %37 = math.exp %36 : vector<128x128xf32>
    %cst_11 = arith.constant dense<0.000000e+00> : vector<128xf32>
    %38 = vector.multi_reduction <add>, %37, %cst_11 [1] : vector<128x128xf32> to vector<128xf32>
    %39 = vector.shape_cast %38 : vector<128xf32> to vector<128x1xf32>
    %40 = arith.subf %29, %34 : vector<128x1xf32>
    %41 = math.exp %40 : vector<128x1xf32>
    %42 = arith.addf %39, %41 : vector<128x1xf32>
    %43 = math.log %42 : vector<128x1xf32>
    %44 = arith.addf %34, %43 : vector<128x1xf32>
    %45 = arith.subf %44, %29 : vector<128x1xf32>
    %c16_i32_12 = arith.constant 16 : i32
    %46 = vector.broadcast %c16_i32_12 : i32 to vector<128x1xi32>
    %47 = arith.cmpi slt, %8, %46 : vector<128x1xi32>
    %cst_13 = arith.constant 0.000000e+00 : f32
    %48 = vector.broadcast %cst_13 : f32 to vector<128x1xf32>
    %49 = arith.select %47, %45, %48 : vector<128x1xi1>, vector<128x1xf32>
    %50 = vector.shape_cast %49 : vector<128x1xf32> to vector<1x128xf32>
    %c0_14 = arith.constant 0 : index
    %c0_15 = arith.constant 0 : index
    %51 = vector.load %arg3[%c0_14, %c0_15] : memref<1x128xf32, #tpu.memory_space<vmem>>, vector<1x128xf32>
    tpu.vector_store %arg3[%c0_14, %c0_15], %50 {strides = array<i32>} : memref<1x128xf32, #tpu.memory_space<vmem>>, vector<1x128xf32>,
    return
  }
  func.func @transform_0(%arg0: i32) -> (i32, i32) {
    %c0_i32 = arith.constant 0 : i32
    %c0_i32_0 = arith.constant 0 : i32
    return %arg0, %c0_i32 : i32, i32
  }
  func.func @transform_1(%arg0: i32) -> (i32, i32) {
    %c0_i32 = arith.constant 0 : i32
    %c0_i32_0 = arith.constant 0 : i32
    %c0_i32_1 = arith.constant 0 : i32
    return %c0_i32, %c0_i32_0 : i32, i32
  }
  func.func @transform_2(%arg0: i32) -> (i32, i32) {
    %c0_i32 = arith.constant 0 : i32
    %c0_i32_0 = arith.constant 0 : i32
    return %c0_i32, %arg0 : i32, i32
  }
}

</mosaic_0001>

<llo_original>
// kernel: tpu_custom_call.1
$region0: #{tpu_custom_call.1}
  #allocation0 [shape = 'u32[]', space=smem, size = 0x4, offset = 0x4, fixed_abs, tag = 'smem constant byte address 0x4 - core index']
  #allocation1 [shape = 'u32[144,128]{1,0:T(1,128)}', space=vmem, size = 0x12000, scoped, tag = 'internal scratch']
  %s0 = inlined_call_operand.hbm [shape: bf16[128,128], index: 0, kind: input, shape index: {}]
  %s1 = inlined_call_operand.hbm [shape: bf16[128,128], index: 1, kind: input, shape index: {}]
  %s2 = inlined_call_operand.hbm [shape: f32[1,128], index: 2, kind: output, shape index: {}]
  %s3 = sld [smem:[#allocation0]]
  $region26: #{tpu_custom_call.1} parent=0
    _
  %s5 = ssub.s32 1, %s3
  %s6 = scalar_select 0, %s5, %s3
  $region1: #{tpu_custom_call.1} parent=0
    #allocation2 [shape = 'u8[32768]{0}', space=vmem, size = 0x8000, scoped, tag = 'input window, operand 0, single buffered']
    #allocation3 [shape = 's32[1]{0}', space=sflag, size = 0x4, scoped, tag = 'scoped memory for tpu_custom_call.1']
    #allocation4 [shape = 's32[1]{0}', space=sflag, size = 0x4, scoped, tag = 'scoped memory for tpu_custom_call.1']
    #allocation5 [shape = 'u8[32768]{0}', space=vmem, size = 0x8000, scoped, tag = 'input window, operand 1, single buffered']
    #allocation6 [shape = 's32[1]{0}', space=sflag, size = 0x4, scoped, tag = 'scoped memory for tpu_custom_call.1']
    #allocation7 [shape = 'u8[512]{0}', space=vmem, size = 0x400, scoped, tag = 'output window, operand 0, single buffered']
    %7 = vsyncpa [#allocation3], 0
    %8 = vsyncpa [#allocation6], 0
    %9 = vsyncpa [#allocation4], 0
    // Predicated region
    $region2: #{tpu_custom_call.1} parent=1 // pred_check
      _
    $region3: #{tpu_custom_call.1} parent=1 // pred_check_branch
      %11 = sbr.rel (0) target = $region5
    $region4: #{tpu_custom_call.1} parent=1 // pred_region
      %s13 = ssub.s32 1024, 1024
      %14 = vsyncadd [#allocation3], %s13
      %s15 = sshll.u32 [#allocation2], 4
      %s16 = int_to_ptr.vmem [resolvable:$true] %s15
      %21 = dma.hbm_to_vmem [thread:$0]  %s0, 1024, %s16, [#allocation3], 64, 64, 4
    $region5: #{tpu_custom_call.1} parent=1 // pred_fallthru
      _
    // Predicated region
    $region6: #{tpu_custom_call.1} parent=1 // pred_check
      _
    $region7: #{tpu_custom_call.1} parent=1 // pred_check_branch
      %23 = sbr.rel (0) target = $region9
    $region8: #{tpu_custom_call.1} parent=1 // pred_region
      %s25 = ssub.s32 1024, 1024
      %26 = vsyncadd [#allocation6], %s25
      %s27 = sshll.u32 [#allocation5], 4
      %s28 = int_to_ptr.vmem [resolvable:$true] %s27
      %33 = dma.hbm_to_vmem [thread:$0]  %s1, 1024, %s28, [#allocation6], 64, 64, 4
    $region9: #{tpu_custom_call.1} parent=1 // pred_fallthru
      _
    // Predicated region
    $region10: #{tpu_custom_call.1} parent=1 // pred_check
      _
    $region11: #{tpu_custom_call.1} parent=1 // pred_check_branch
      %35 = sbr.rel (0) target = $region13
    $region12: #{tpu_custom_call.1} parent=1 // pred_region
      %36 = dma.done [#allocation3], 1024
    $region13: #{tpu_custom_call.1} parent=1 // pred_fallthru
      _
    // Predicated region
    $region14: #{tpu_custom_call.1} parent=1 // pred_check
      _
    $region15: #{tpu_custom_call.1} parent=1 // pred_check_branch
      %38 = sbr.rel (0) target = $region17
    $region16: #{tpu_custom_call.1} parent=1 // pred_region
      %39 = dma.done [#allocation6], 1024
    $region17: #{tpu_custom_call.1} parent=1 // pred_fallthru
      _
    %s41 = smul.u32 0, 128
    %v42 = vld [vmem:[#allocation2] sm:$0xf]
    %v43 = vld [vmem:[#allocation2 + $0x4] sm:$0xf]
    %v44 = vld [vmem:[#allocation2 + $0x8] sm:$0xf]
    %v45 = vld [vmem:[#allocation2 + $0xc] sm:$0xf]
    %v46 = vld [vmem:[#allocation2 + $0x10] sm:$0xf]
    %v47 = vld [vmem:[#allocation2 + $0x14] sm:$0xf]
    %v48 = vld [vmem:[#allocation2 + $0x18] sm:$0xf]
    %v49 = vld [vmem:[#allocation2 + $0x1c] sm:$0xf]
    %v50 = vld [vmem:[#allocation2 + $0x20] sm:$0xf]
    %v51 = vld [vmem:[#allocation2 + $0x24] sm:$0xf]
    %v52 = vld [vmem:[#allocation2 + $0x28] sm:$0xf]
    %v53 = vld [vmem:[#allocation2 + $0x2c] sm:$0xf]
    %v54 = vld [vmem:[#allocation2 + $0x30] sm:$0xf]
    %v55 = vld [vmem:[#allocation2 + $0x34] sm:$0xf]
    %v56 = vld [vmem:[#allocation2 + $0x38] sm:$0xf]
    %v57 = vld [vmem:[#allocation2 + $0x3c] sm:$0xf]
    %v58 = vld [vmem:[#allocation5] sm:$0xf]
    %v59 = vld [vmem:[#allocation5 + $0x4] sm:$0xf]
    %v60 = vld [vmem:[#allocation5 + $0x8] sm:$0xf]
    %v61 = vld [vmem:[#allocation5 + $0xc] sm:$0xf]
    %v62 = vld [vmem:[#allocation5 + $0x10] sm:$0xf]
    %v63 = vld [vmem:[#allocation5 + $0x14] sm:$0xf]
    %v64 = vld [vmem:[#allocation5 + $0x18] sm:$0xf]
    %v65 = vld [vmem:[#allocation5 + $0x1c] sm:$0xf]
    %v66 = vld [vmem:[#allocation5 + $0x20] sm:$0xf]
    %v67 = vld [vmem:[#allocation5 + $0x24] sm:$0xf]
    %v68 = vld [vmem:[#allocation5 + $0x28] sm:$0xf]
    %v69 = vld [vmem:[#allocation5 + $0x2c] sm:$0xf]
    %v70 = vld [vmem:[#allocation5 + $0x30] sm:$0xf]
    %v71 = vld [vmem:[#allocation5 + $0x34] sm:$0xf]
    %v72 = vld [vmem:[#allocation5 + $0x38] sm:$0xf]
    %v73 = vld [vmem:[#allocation5 + $0x3c] sm:$0xf]
    %v90 = vunpack.c.l.b16 %v42
    %v91 = vunpack.c.l.b16 %v43
    %v92 = vunpack.c.l.b16 %v44
    %v93 = vunpack.c.l.b16 %v45
    %v94 = vunpack.c.l.b16 %v46
    %v95 = vunpack.c.l.b16 %v47
    %v96 = vunpack.c.l.b16 %v48
    %v97 = vunpack.c.l.b16 %v49
    %v98 = vunpack.c.l.b16 %v50
    %v99 = vunpack.c.l.b16 %v51
    %v100 = vunpack.c.l.b16 %v52
    %v101 = vunpack.c.l.b16 %v53
    %v102 = vunpack.c.l.b16 %v54
    %v103 = vunpack.c.l.b16 %v55
    %v104 = vunpack.c.l.b16 %v56
    %v105 = vunpack.c.l.b16 %v57
    %v106 = vpack.c.b16 %v91, %v90
    %v107 = vpack.c.b16 %v93, %v92
    %v108 = vpack.c.b16 %v95, %v94
    %v109 = vpack.c.b16 %v97, %v96
    %v110 = vpack.c.b16 %v99, %v98
    %v111 = vpack.c.b16 %v101, %v100
    %v112 = vpack.c.b16 %v103, %v102
    %v113 = vpack.c.b16 %v105, %v104
    %v138 = vunpack.c.l.b16 %v58
    %v139 = vunpack.c.l.b16 %v59
    %v140 = vunpack.c.l.b16 %v60
    %v141 = vunpack.c.l.b16 %v61
    %v142 = vunpack.c.l.b16 %v62
    %v143 = vunpack.c.l.b16 %v63
    %v144 = vunpack.c.l.b16 %v64
    %v145 = vunpack.c.l.b16 %v65
    %v146 = vunpack.c.l.b16 %v66
    %v147 = vunpack.c.l.b16 %v67
    %v148 = vunpack.c.l.b16 %v68
    %v149 = vunpack.c.l.b16 %v69
    %v150 = vunpack.c.l.b16 %v70
    %v151 = vunpack.c.l.b16 %v71
    %v152 = vunpack.c.l.b16 %v72
    %v153 = vunpack.c.l.b16 %v73
    %v154 = vpack.c.b16 %v139, %v138
    %v155 = vpack.c.b16 %v141, %v140
    %v156 = vpack.c.b16 %v143, %v142
    %v157 = vpack.c.b16 %v145, %v144
    %v158 = vpack.c.b16 %v147, %v146
    %v159 = vpack.c.b16 %v149, %v148
    %v160 = vpack.c.b16 %v151, %v150
    %v161 = vpack.c.b16 %v153, %v152
    %170 = vmatprep.subr.bf16.mxu0 0
    %171 = vmatpush1.bf16.msra.mxu0 %v161
    %172 = vmatprep.subr.bf16.mxu0 0
    %173 = vmatpush1.bf16.msra.mxu0 %v160
    %174 = vmatprep.subr.bf16.mxu0 0
    %175 = vmatpush1.bf16.msra.mxu0 %v159
    %176 = vmatprep.subr.bf16.mxu0 0
    %177 = vmatpush1.bf16.msra.mxu0 %v158
    %178 = vmatprep.subr.bf16.mxu0 0
    %179 = vmatpush1.bf16.msra.mxu0 %v157
    %180 = vmatprep.subr.bf16.mxu0 0
    %181 = vmatpush1.bf16.msra.mxu0 %v156
    %182 = vmatprep.subr.bf16.mxu0 0
    %183 = vmatpush1.bf16.msra.mxu0 %v155
    %184 = vmatprep.subr.bf16.mxu0 0
    %185 = vmatpush1.bf16.msra.mxu0 %v154
    %186 = vmatprep.subr.bf16.mxu0 0
    %187 = vmatpush2.bf16.msra.mxu0 0
    %188 = vmatprep.subr.bf16.mxu0 0
    %189 = vmatpush2.bf16.msra.mxu0 0
    %190 = vmatprep.subr.bf16.mxu0 0
    %191 = vmatpush2.bf16.msra.mxu0 0
    %192 = vmatprep.subr.bf16.mxu0 0
    %193 = vmatpush2.bf16.msra.mxu0 0
    %194 = vmatprep.subr.bf16.mxu0 0
    %195 = vmatpush2.bf16.msra.mxu0 0
    %196 = vmatprep.subr.bf16.mxu0 0
    %197 = vmatpush2.bf16.msra.mxu0 0
    %198 = vmatprep.subr.bf16.mxu0 0
    %199 = vmatpush2.bf16.msra.mxu0 0
    %200 = vmatprep.subr.bf16.mxu0 0
    %201 = vmatpush2.bf16.msra.mxu0 0
    %202 = vmatprep.mubr.bf16.mxu0 0
    %203 = vmatmul.mubr.bf16.gmra.mxu0 %v106
    %v204 = vpop.f32.mrf.mxu0
    %v205 = vadd.f32 0.0, %v204
    %v206 = vpop.f32.mrf.mxu0
    %v207 = vpop.f32.mrf.mxu0
    %v208 = vadd.f32 0.0, %v207
    %v209 = vpop.f32.mrf.mxu0
    %210 = vmatprep.mubr.bf16.mxu0 0
    %211 = vmatmul.mubr.bf16.gmra.mxu0 %v107
    %v212 = vpop.f32.mrf.mxu0
    %v213 = vadd.f32 0.0, %v212
    %v214 = vpop.f32.mrf.mxu0
    %v215 = vpop.f32.mrf.mxu0
    %v216 = vadd.f32 0.0, %v215
    %v217 = vpop.f32.mrf.mxu0
    %218 = vmatprep.mubr.bf16.mxu0 0
    %219 = vmatmul.mubr.bf16.gmra.mxu0 %v108
    %v220 = vpop.f32.mrf.mxu0
    %v221 = vadd.f32 0.0, %v220
    %v222 = vpop.f32.mrf.mxu0
    %v223 = vpop.f32.mrf.mxu0
    %v224 = vadd.f32 0.0, %v223
    %v225 = vpop.f32.mrf.mxu0
    %226 = vmatprep.mubr.bf16.mxu0 0
    %227 = vmatmul.mubr.bf16.gmra.mxu0 %v109
    %v228 = vpop.f32.mrf.mxu0
    %v229 = vadd.f32 0.0, %v228
    %v230 = vpop.f32.mrf.mxu0
    %v231 = vpop.f32.mrf.mxu0
    %v232 = vadd.f32 0.0, %v231
    %v233 = vpop.f32.mrf.mxu0
    %234 = vmatprep.mubr.bf16.mxu0 0
    %235 = vmatmul.mubr.bf16.gmra.mxu0 %v110
    %v236 = vpop.f32.mrf.mxu0
    %v237 = vadd.f32 0.0, %v236
    %v238 = vpop.f32.mrf.mxu0
    %v239 = vpop.f32.mrf.mxu0
    %v240 = vadd.f32 0.0, %v239
    %v241 = vpop.f32.mrf.mxu0
    %242 = vmatprep.mubr.bf16.mxu0 0
    %243 = vmatmul.mubr.bf16.gmra.mxu0 %v111
    %v244 = vpop.f32.mrf.mxu0
    %v245 = vadd.f32 0.0, %v244
    %v246 = vpop.f32.mrf.mxu0
    %v247 = vpop.f32.mrf.mxu0
    %v248 = vadd.f32 0.0, %v247
    %v249 = vpop.f32.mrf.mxu0
    %250 = vmatprep.mubr.bf16.mxu0 0
    %251 = vmatmul.mubr.bf16.gmra.mxu0 %v112
    %v252 = vpop.f32.mrf.mxu0
    %v253 = vadd.f32 0.0, %v252
    %v254 = vpop.f32.mrf.mxu0
    %v255 = vpop.f32.mrf.mxu0
    %v256 = vadd.f32 0.0, %v255
    %v257 = vpop.f32.mrf.mxu0
    %258 = vmatprep.mubr.bf16.mxu0 0
    %259 = vmatmul.mubr.bf16.gmra.mxu0 %v113
    %v260 = vpop.f32.mrf.mxu0
    %v261 = vadd.f32 0.0, %v260
    %v262 = vpop.f32.mrf.mxu0
    %v263 = vpop.f32.mrf.mxu0
    %v264 = vadd.f32 0.0, %v263
    %v265 = vpop.f32.mrf.mxu0
    %266 = vdwg.mxu0
    %v267 = vmul.f32 %v205, 2.0
    %v268 = vmul.f32 %v208, 2.0
    %v269 = vmul.f32 %v213, 2.0
    %v270 = vmul.f32 %v216, 2.0
    %v271 = vmul.f32 %v221, 2.0
    %v272 = vmul.f32 %v224, 2.0
    %v273 = vmul.f32 %v229, 2.0
    %v274 = vmul.f32 %v232, 2.0
    %v275 = vmul.f32 %v237, 2.0
    %v276 = vmul.f32 %v240, 2.0
    %v277 = vmul.f32 %v245, 2.0
    %v278 = vmul.f32 %v248, 2.0
    %v279 = vmul.f32 %v253, 2.0
    %v280 = vmul.f32 %v256, 2.0
    %v281 = vmul.f32 %v261, 2.0
    %v282 = vmul.f32 %v264, 2.0
    %v283 = vlaneseq
    %v284 = vshrl.u32 %v283, 7
    %v285 = vadd.s32 %v284, 8
    %v286 = vadd.s32 %v284, 16
    %v287 = vadd.s32 %v284, 24
    %v288 = vadd.s32 %v284, 32
    %v289 = vadd.s32 %v284, 40
    %v290 = vadd.s32 %v284, 48
    %v291 = vadd.s32 %v284, 56
    %v292 = vadd.s32 %v284, 64
    %v293 = vadd.s32 %v284, 72
    %v294 = vadd.s32 %v284, 80
    %v295 = vadd.s32 %v284, 88
    %v296 = vadd.s32 %v284, 96
    %v297 = vadd.s32 %v284, 104
    %v298 = vadd.s32 %v284, 112
    %v299 = vadd.s32 %v284, 120
    %v300 = vstv %s41
    %v301 = vadd.s32 %v300, %v284
    %v302 = vadd.s32 %v300, %v285
    %v303 = vadd.s32 %v300, %v286
    %v304 = vadd.s32 %v300, %v287
    %v305 = vadd.s32 %v300, %v288
    %v306 = vadd.s32 %v300, %v289
    %v307 = vadd.s32 %v300, %v290
    %v308 = vadd.s32 %v300, %v291
    %v309 = vadd.s32 %v300, %v292
    %v310 = vadd.s32 %v300, %v293
    %v311 = vadd.s32 %v300, %v294
    %v312 = vadd.s32 %v300, %v295
    %v313 = vadd.s32 %v300, %v296
    %v314 = vadd.s32 %v300, %v297
    %v315 = vadd.s32 %v300, %v298
    %v316 = vadd.s32 %v300, %v299
    %vm317 = vcmp.lt.s32.totalorder %v301, 8
    %vm318 = vcmp.lt.s32.totalorder %v302, 8
    %vm319 = vcmp.lt.s32.totalorder %v303, 8
    %vm320 = vcmp.lt.s32.totalorder %v304, 8
    %vm321 = vcmp.lt.s32.totalorder %v305, 8
    %vm322 = vcmp.lt.s32.totalorder %v306, 8
    %vm323 = vcmp.lt.s32.totalorder %v307, 8
    %vm324 = vcmp.lt.s32.totalorder %v308, 8
    %vm325 = vcmp.lt.s32.totalorder %v309, 8
    %vm326 = vcmp.lt.s32.totalorder %v310, 8
    %vm327 = vcmp.lt.s32.totalorder %v311, 8
    %vm328 = vcmp.lt.s32.totalorder %v312, 8
    %vm329 = vcmp.lt.s32.totalorder %v313, 8
    %vm330 = vcmp.lt.s32.totalorder %v314, 8
    %vm331 = vcmp.lt.s32.totalorder %v315, 8
    %vm332 = vcmp.lt.s32.totalorder %v316, 8
    %v333 = vadd.s32 %v301, 8
    %v334 = vadd.s32 %v302, 8
    %v335 = vadd.s32 %v303, 8
    %v336 = vadd.s32 %v304, 8
    %v337 = vadd.s32 %v305, 8
    %v338 = vadd.s32 %v306, 8
    %v339 = vadd.s32 %v307, 8
    %v340 = vadd.s32 %v308, 8
    %v341 = vadd.s32 %v309, 8
    %v342 = vadd.s32 %v310, 8
    %v343 = vadd.s32 %v311, 8
    %v344 = vadd.s32 %v312, 8
    %v345 = vadd.s32 %v313, 8
    %v346 = vadd.s32 %v314, 8
    %v347 = vadd.s32 %v315, 8
    %v348 = vadd.s32 %v316, 8
    %v349 = vsub.s32 %v301, 8
    %v350 = vsub.s32 %v302, 8
    %v351 = vsub.s32 %v303, 8
    %v352 = vsub.s32 %v304, 8
    %v353 = vsub.s32 %v305, 8
    %v354 = vsub.s32 %v306, 8
    %v355 = vsub.s32 %v307, 8
    %v356 = vsub.s32 %v308, 8
    %v357 = vsub.s32 %v309, 8
    %v358 = vsub.s32 %v310, 8
    %v359 = vsub.s32 %v311, 8
    %v360 = vsub.s32 %v312, 8
    %v361 = vsub.s32 %v313, 8
    %v362 = vsub.s32 %v314, 8
    %v363 = vsub.s32 %v315, 8
    %v364 = vsub.s32 %v316, 8
    %v365 = vsel %vm317, %v333, %v349
    %v366 = vsel %vm318, %v334, %v350
    %v367 = vsel %vm319, %v335, %v351
    %v368 = vsel %vm320, %v336, %v352
    %v369 = vsel %vm321, %v337, %v353
    %v370 = vsel %vm322, %v338, %v354
    %v371 = vsel %vm323, %v339, %v355
    %v372 = vsel %vm324, %v340, %v356
    %v373 = vsel %vm325, %v341, %v357
    %v374 = vsel %vm326, %v342, %v358
    %v375 = vsel %vm327, %v343, %v359
    %v376 = vsel %vm328, %v344, %v360
    %v377 = vsel %vm329, %v345, %v361
    %v378 = vsel %vm330, %v346, %v362
    %v379 = vsel %vm331, %v347, %v363
    %v380 = vsel %vm332, %v348, %v364
    %v381 = vlaneseq
    %v382 = vand.u32 %v381, 127
    %vm383 = vcmp.eq.s32.totalorder %v382, %v365
    %vm384 = vcmp.eq.s32.totalorder %v382, %v366
    %vm385 = vcmp.eq.s32.totalorder %v382, %v367
    %vm386 = vcmp.eq.s32.totalorder %v382, %v368
    %vm387 = vcmp.eq.s32.totalorder %v382, %v369
    %vm388 = vcmp.eq.s32.totalorder %v382, %v370
    %vm389 = vcmp.eq.s32.totalorder %v382, %v371
    %vm390 = vcmp.eq.s32.totalorder %v382, %v372
    %vm391 = vcmp.eq.s32.totalorder %v382, %v373
    %vm392 = vcmp.eq.s32.totalorder %v382, %v374
    %vm393 = vcmp.eq.s32.totalorder %v382, %v375
    %vm394 = vcmp.eq.s32.totalorder %v382, %v376
    %vm395 = vcmp.eq.s32.totalorder %v382, %v377
    %vm396 = vcmp.eq.s32.totalorder %v382, %v378
    %vm397 = vcmp.eq.s32.totalorder %v382, %v379
    %vm398 = vcmp.eq.s32.totalorder %v382, %v380
    %vm399 = vcmp.ne.s32.totalorder %v382, %v301
    %vm400 = vcmp.ne.s32.totalorder %v382, %v302
    %vm401 = vcmp.ne.s32.totalorder %v382, %v303
    %vm402 = vcmp.ne.s32.totalorder %v382, %v304
    %vm403 = vcmp.ne.s32.totalorder %v382, %v305
    %vm404 = vcmp.ne.s32.totalorder %v382, %v306
    %vm405 = vcmp.ne.s32.totalorder %v382, %v307
    %vm406 = vcmp.ne.s32.totalorder %v382, %v308
    %vm407 = vcmp.ne.s32.totalorder %v382, %v309
    %vm408 = vcmp.ne.s32.totalorder %v382, %v310
    %vm409 = vcmp.ne.s32.totalorder %v382, %v311
    %vm410 = vcmp.ne.s32.totalorder %v382, %v312
    %vm411 = vcmp.ne.s32.totalorder %v382, %v313
    %vm412 = vcmp.ne.s32.totalorder %v382, %v314
    %vm413 = vcmp.ne.s32.totalorder %v382, %v315
    %vm414 = vcmp.ne.s32.totalorder %v382, %v316
    %vm415 = vmxor %vm383, 1
    %vm416 = vmxor %vm384, 1
    %vm417 = vmxor %vm385, 1
    %vm418 = vmxor %vm386, 1
    %vm419 = vmxor %vm387, 1
    %vm420 = vmxor %vm388, 1
    %vm421 = vmxor %vm389, 1
    %vm422 = vmxor %vm390, 1
    %vm423 = vmxor %vm391, 1
    %vm424 = vmxor %vm392, 1
    %vm425 = vmxor %vm393, 1
    %vm426 = vmxor %vm394, 1
    %vm427 = vmxor %vm395, 1
    %vm428 = vmxor %vm396, 1
    %vm429 = vmxor %vm397, 1
    %vm430 = vmxor %vm398, 1
    %vm431 = vmand %vm399, %vm415
    %vm432 = vmand %vm400, %vm416
    %vm433 = vmand %vm401, %vm417
    %vm434 = vmand %vm402, %vm418
    %vm435 = vmand %vm403, %vm419
    %vm436 = vmand %vm404, %vm420
    %vm437 = vmand %vm405, %vm421
    %vm438 = vmand %vm406, %vm422
    %vm439 = vmand %vm407, %vm423
    %vm440 = vmand %vm408, %vm424
    %vm441 = vmand %vm409, %vm425
    %vm442 = vmand %vm410, %vm426
    %vm443 = vmand %vm411, %vm427
    %vm444 = vmand %vm412, %vm428
    %vm445 = vmand %vm413, %vm429
    %vm446 = vmand %vm414, %vm430
    %vm447 = vcmp.lt.s32.totalorder %v382, 16
    %vm448 = vmand %vm431, %vm447
    %vm449 = vmand %vm432, %vm447
    %vm450 = vmand %vm433, %vm447
    %vm451 = vmand %vm434, %vm447
    %vm452 = vmand %vm435, %vm447
    %vm453 = vmand %vm436, %vm447
    %vm454 = vmand %vm437, %vm447
    %vm455 = vmand %vm438, %vm447
    %vm456 = vmand %vm439, %vm447
    %vm457 = vmand %vm440, %vm447
    %vm458 = vmand %vm441, %vm447
    %vm459 = vmand %vm442, %vm447
    %vm460 = vmand %vm443, %vm447
    %vm461 = vmand %vm444, %vm447
    %vm462 = vmand %vm445, %vm447
    %vm463 = vmand %vm446, %vm447
    %v464 = vsel %vm383, %v267, 0.0
    %v465 = vsel %vm384, %v268, 0.0
    %v466 = vsel %vm385, %v269, 0.0
    %v467 = vsel %vm386, %v270, 0.0
    %v468 = vsel %vm387, %v271, 0.0
    %v469 = vsel %vm388, %v272, 0.0
    %v470 = vsel %vm389, %v273, 0.0
    %v471 = vsel %vm390, %v274, 0.0
    %v472 = vsel %vm391, %v275, 0.0
    %v473 = vsel %vm392, %v276, 0.0
    %v474 = vsel %vm393, %v277, 0.0
    %v475 = vsel %vm394, %v278, 0.0
    %v476 = vsel %vm395, %v279, 0.0
    %v477 = vsel %vm396, %v280, 0.0
    %v478 = vsel %vm397, %v281, 0.0
    %v479 = vsel %vm398, %v282, 0.0
    %480 = vadd.xlane.f32.xlu0 %v464
    %v481 = vpop.xlane.xlu0 %480
    %482 = vadd.xlane.f32.xlu0 %v465
    %v483 = vpop.xlane.xlu0 %482
    %484 = vadd.xlane.f32.xlu0 %v466
    %v485 = vpop.xlane.xlu0 %484
    %486 = vadd.xlane.f32.xlu0 %v467
    %v487 = vpop.xlane.xlu0 %486
    %488 = vadd.xlane.f32.xlu0 %v468
    %v489 = vpop.xlane.xlu0 %488
    %490 = vadd.xlane.f32.xlu0 %v469
    %v491 = vpop.xlane.xlu0 %490
    %492 = vadd.xlane.f32.xlu0 %v470
    %v493 = vpop.xlane.xlu0 %492
    %494 = vadd.xlane.f32.xlu0 %v471
    %v495 = vpop.xlane.xlu0 %494
    %496 = vadd.xlane.f32.xlu0 %v472
    %v497 = vpop.xlane.xlu0 %496
    %498 = vadd.xlane.f32.xlu0 %v473
    %v499 = vpop.xlane.xlu0 %498
    %500 = vadd.xlane.f32.xlu0 %v474
    %v501 = vpop.xlane.xlu0 %500
    %502 = vadd.xlane.f32.xlu0 %v475
    %v503 = vpop.xlane.xlu0 %502
    %504 = vadd.xlane.f32.xlu0 %v476
    %v505 = vpop.xlane.xlu0 %504
    %506 = vadd.xlane.f32.xlu0 %v477
    %v507 = vpop.xlane.xlu0 %506
    %508 = vadd.xlane.f32.xlu0 %v478
    %v509 = vpop.xlane.xlu0 %508
    %510 = vadd.xlane.f32.xlu0 %v479
    %v511 = vpop.xlane.xlu0 %510
    %v512 = vsel %vm448, %v267, -1e+30
    %v513 = vsel %vm449, %v268, -1e+30
    %v514 = vsel %vm450, %v269, -1e+30
    %v515 = vsel %vm451, %v270, -1e+30
    %v516 = vsel %vm452, %v271, -1e+30
    %v517 = vsel %vm453, %v272, -1e+30
    %v518 = vsel %vm454, %v273, -1e+30
    %v519 = vsel %vm455, %v274, -1e+30
    %v520 = vsel %vm456, %v275, -1e+30
    %v521 = vsel %vm457, %v276, -1e+30
    %v522 = vsel %vm458, %v277, -1e+30
    %v523 = vsel %vm459, %v278, -1e+30
    %v524 = vsel %vm460, %v279, -1e+30
    %v525 = vsel %vm461, %v280, -1e+30
    %v526 = vsel %vm462, %v281, -1e+30
    %v527 = vsel %vm463, %v282, -1e+30
    %528 = vmax.xlane.f32.xlu0 %v512
    %v529 = vpop.xlane.xlu0 %528
    %530 = vmax.xlane.f32.xlu0 %v513
    %v531 = vpop.xlane.xlu0 %530
    %532 = vmax.xlane.f32.xlu0 %v514
    %v533 = vpop.xlane.xlu0 %532
    %534 = vmax.xlane.f32.xlu0 %v515
    %v535 = vpop.xlane.xlu0 %534
    %536 = vmax.xlane.f32.xlu0 %v516
    %v537 = vpop.xlane.xlu0 %536
    %538 = vmax.xlane.f32.xlu0 %v517
    %v539 = vpop.xlane.xlu0 %538
    %540 = vmax.xlane.f32.xlu0 %v518
    %v541 = vpop.xlane.xlu0 %540
    %542 = vmax.xlane.f32.xlu0 %v519
    %v543 = vpop.xlane.xlu0 %542
    %544 = vmax.xlane.f32.xlu0 %v520
    %v545 = vpop.xlane.xlu0 %544
    %546 = vmax.xlane.f32.xlu0 %v521
    %v547 = vpop.xlane.xlu0 %546
    %548 = vmax.xlane.f32.xlu0 %v522
    %v549 = vpop.xlane.xlu0 %548
    %550 = vmax.xlane.f32.xlu0 %v523
    %v551 = vpop.xlane.xlu0 %550
    %552 = vmax.xlane.f32.xlu0 %v524
    %v553 = vpop.xlane.xlu0 %552
    %554 = vmax.xlane.f32.xlu0 %v525
    %v555 = vpop.xlane.xlu0 %554
    %556 = vmax.xlane.f32.xlu0 %v526
    %v557 = vpop.xlane.xlu0 %556
    %558 = vmax.xlane.f32.xlu0 %v527
    %v559 = vpop.xlane.xlu0 %558
    %v560 = vmax.f32 %v529, %v481
    %v561 = vmax.f32 %v531, %v483
    %v562 = vmax.f32 %v533, %v485
    %v563 = vmax.f32 %v535, %v487
    %v564 = vmax.f32 %v537, %v489
    %v565 = vmax.f32 %v539, %v491
    %v566 = vmax.f32 %v541, %v493
    %v567 = vmax.f32 %v543, %v495
    %v568 = vmax.f32 %v545, %v497
    %v569 = vmax.f32 %v547, %v499
    %v570 = vmax.f32 %v549, %v501
    %v571 = vmax.f32 %v551, %v503
    %v572 = vmax.f32 %v553, %v505
    %v573 = vmax.f32 %v555, %v507
    %v574 = vmax.f32 %v557, %v509
    %v575 = vmax.f32 %v559, %v511
    %v576 = vsub.f32 %v512, %v560
    %v577 = vsub.f32 %v513, %v561
    %v578 = vsub.f32 %v514, %v562
    %v579 = vsub.f32 %v515, %v563
    %v580 = vsub.f32 %v516, %v564
    %v581 = vsub.f32 %v517, %v565
    %v582 = vsub.f32 %v518, %v566
    %v583 = vsub.f32 %v519, %v567
    %v584 = vsub.f32 %v520, %v568
    %v585 = vsub.f32 %v521, %v569
    %v586 = vsub.f32 %v522, %v570
    %v587 = vsub.f32 %v523, %v571
    %v588 = vsub.f32 %v524, %v572
    %v589 = vsub.f32 %v525, %v573
    %v590 = vsub.f32 %v526, %v574
    %v591 = vsub.f32 %v527, %v575
    %v592 = vmul.f32 %v576, 1.442695
    %v593 = vpow.pop %v592
    %v594 = vmul.f32 %v577, 1.442695
    %v595 = vpow.pop %v594
    %v596 = vmul.f32 %v578, 1.442695
    %v597 = vpow.pop %v596
    %v598 = vmul.f32 %v579, 1.442695
    %v599 = vpow.pop %v598
    %v600 = vmul.f32 %v580, 1.442695
    %v601 = vpow.pop %v600
    %v602 = vmul.f32 %v581, 1.442695
    %v603 = vpow.pop %v602
    %v604 = vmul.f32 %v582, 1.442695
    %v605 = vpow.pop %v604
    %v606 = vmul.f32 %v583, 1.442695
    %v607 = vpow.pop %v606
    %v608 = vmul.f32 %v584, 1.442695
    %v609 = vpow.pop %v608
    %v610 = vmul.f32 %v585, 1.442695
    %v611 = vpow.pop %v610
    %v612 = vmul.f32 %v586, 1.442695
    %v613 = vpow.pop %v612
    %v614 = vmul.f32 %v587, 1.442695
    %v615 = vpow.pop %v614
    %v616 = vmul.f32 %v588, 1.442695
    %v617 = vpow.pop %v616
    %v618 = vmul.f32 %v589, 1.442695
    %v619 = vpow.pop %v618
    %v620 = vmul.f32 %v590, 1.442695
    %v621 = vpow.pop %v620
    %v622 = vmul.f32 %v591, 1.442695
    %v623 = vpow.pop %v622
    %624 = vadd.xlane.f32.xlu0 %v593
    %v625 = vpop.xlane.xlu0 %624
    %626 = vadd.xlane.f32.xlu0 %v595
    %v627 = vpop.xlane.xlu0 %626
    %628 = vadd.xlane.f32.xlu0 %v597
    %v629 = vpop.xlane.xlu0 %628
    %630 = vadd.xlane.f32.xlu0 %v599
    %v631 = vpop.xlane.xlu0 %630
    %632 = vadd.xlane.f32.xlu0 %v601
    %v633 = vpop.xlane.xlu0 %632
    %634 = vadd.xlane.f32.xlu0 %v603
    %v635 = vpop.xlane.xlu0 %634
    %636 = vadd.xlane.f32.xlu0 %v605
    %v637 = vpop.xlane.xlu0 %636
    %638 = vadd.xlane.f32.xlu0 %v607
    %v639 = vpop.xlane.xlu0 %638
    %640 = vadd.xlane.f32.xlu0 %v609
    %v641 = vpop.xlane.xlu0 %640
    %642 = vadd.xlane.f32.xlu0 %v611
    %v643 = vpop.xlane.xlu0 %642
    %644 = vadd.xlane.f32.xlu0 %v613
    %v645 = vpop.xlane.xlu0 %644
    %646 = vadd.xlane.f32.xlu0 %v615
    %v647 = vpop.xlane.xlu0 %646
    %648 = vadd.xlane.f32.xlu0 %v617
    %v649 = vpop.xlane.xlu0 %648
    %650 = vadd.xlane.f32.xlu0 %v619
    %v651 = vpop.xlane.xlu0 %650
    %652 = vadd.xlane.f32.xlu0 %v621
    %v653 = vpop.xlane.xlu0 %652
    %654 = vadd.xlane.f32.xlu0 %v623
    %v655 = vpop.xlane.xlu0 %654
    %v656 = vsub.f32 %v481, %v560
    %v657 = vsub.f32 %v483, %v561
    %v658 = vsub.f32 %v485, %v562
    %v659 = vsub.f32 %v487, %v563
    %v660 = vsub.f32 %v489, %v564
    %v661 = vsub.f32 %v491, %v565
    %v662 = vsub.f32 %v493, %v566
    %v663 = vsub.f32 %v495, %v567
    %v664 = vsub.f32 %v497, %v568
    %v665 = vsub.f32 %v499, %v569
    %v666 = vsub.f32 %v501, %v570
    %v667 = vsub.f32 %v503, %v571
    %v668 = vsub.f32 %v505, %v572
    %v669 = vsub.f32 %v507, %v573
    %v670 = vsub.f32 %v509, %v574
    %v671 = vsub.f32 %v511, %v575
    %v672 = vmul.f32 %v656, 1.442695
    %v673 = vpow.pop %v672
    %v674 = vmul.f32 %v657, 1.442695
    %v675 = vpow.pop %v674
    %v676 = vmul.f32 %v658, 1.442695
    %v677 = vpow.pop %v676
    %v678 = vmul.f32 %v659, 1.442695
    %v679 = vpow.pop %v678
    %v680 = vmul.f32 %v660, 1.442695
    %v681 = vpow.pop %v680
    %v682 = vmul.f32 %v661, 1.442695
    %v683 = vpow.pop %v682
    %v684 = vmul.f32 %v662, 1.442695
    %v685 = vpow.pop %v684
    %v686 = vmul.f32 %v663, 1.442695
    %v687 = vpow.pop %v686
    %v688 = vmul.f32 %v664, 1.442695
    %v689 = vpow.pop %v688
    %v690 = vmul.f32 %v665, 1.442695
    %v691 = vpow.pop %v690
    %v692 = vmul.f32 %v666, 1.442695
    %v693 = vpow.pop %v692
    %v694 = vmul.f32 %v667, 1.442695
    %v695 = vpow.pop %v694
    %v696 = vmul.f32 %v668, 1.442695
    %v697 = vpow.pop %v696
    %v698 = vmul.f32 %v669, 1.442695
    %v699 = vpow.pop %v698
    %v700 = vmul.f32 %v670, 1.442695
    %v701 = vpow.pop %v700
    %v702 = vmul.f32 %v671, 1.442695
    %v703 = vpow.pop %v702
    %v704 = vadd.f32 %v625, %v673
    %v705 = vadd.f32 %v627, %v675
    %v706 = vadd.f32 %v629, %v677
    %v707 = vadd.f32 %v631, %v679
    %v708 = vadd.f32 %v633, %v681
    %v709 = vadd.f32 %v635, %v683
    %v710 = vadd.f32 %v637, %v685
    %v711 = vadd.f32 %v639, %v687
    %v712 = vadd.f32 %v641, %v689
    %v713 = vadd.f32 %v643, %v691
    %v714 = vadd.f32 %v645, %v693
    %v715 = vadd.f32 %v647, %v695
    %v716 = vadd.f32 %v649, %v697
    %v717 = vadd.f32 %v651, %v699
    %v718 = vadd.f32 %v653, %v701
    %v719 = vadd.f32 %v655, %v703
    %v720 = vlog2.pop %v704
    %v721 = vmul.f32 %v720, 0.6931472
    %v722 = vlog2.pop %v705
    %v723 = vmul.f32 %v722, 0.6931472
    %v724 = vlog2.pop %v706
    %v725 = vmul.f32 %v724, 0.6931472
    %v726 = vlog2.pop %v707
    %v727 = vmul.f32 %v726, 0.6931472
    %v728 = vlog2.pop %v708
    %v729 = vmul.f32 %v728, 0.6931472
    %v730 = vlog2.pop %v709
    %v731 = vmul.f32 %v730, 0.6931472
    %v732 = vlog2.pop %v710
    %v733 = vmul.f32 %v732, 0.6931472
    %v734 = vlog2.pop %v711
    %v735 = vmul.f32 %v734, 0.6931472
    %v736 = vlog2.pop %v712
    %v737 = vmul.f32 %v736, 0.6931472
    %v738 = vlog2.pop %v713
    %v739 = vmul.f32 %v738, 0.6931472
    %v740 = vlog2.pop %v714
    %v741 = vmul.f32 %v740, 0.6931472
    %v742 = vlog2.pop %v715
    %v743 = vmul.f32 %v742, 0.6931472
    %v744 = vlog2.pop %v716
    %v745 = vmul.f32 %v744, 0.6931472
    %v746 = vlog2.pop %v717
    %v747 = vmul.f32 %v746, 0.6931472
    %v748 = vlog2.pop %v718
    %v749 = vmul.f32 %v748, 0.6931472
    %v750 = vlog2.pop %v719
    %v751 = vmul.f32 %v750, 0.6931472
    %v752 = vadd.f32 %v560, %v721
    %v753 = vadd.f32 %v561, %v723
    %v754 = vadd.f32 %v562, %v725
    %v755 = vadd.f32 %v563, %v727
    %v756 = vadd.f32 %v564, %v729
    %v757 = vadd.f32 %v565, %v731
    %v758 = vadd.f32 %v566, %v733
    %v759 = vadd.f32 %v567, %v735
    %v760 = vadd.f32 %v568, %v737
    %v761 = vadd.f32 %v569, %v739
    %v762 = vadd.f32 %v570, %v741
    %v763 = vadd.f32 %v571, %v743
    %v764 = vadd.f32 %v572, %v745
    %v765 = vadd.f32 %v573, %v747
    %v766 = vadd.f32 %v574, %v749
    %v767 = vadd.f32 %v575, %v751
    %v768 = vsub.f32 %v752, %v481
    %v769 = vsub.f32 %v753, %v483
    %v770 = vsub.f32 %v754, %v485
    %v771 = vsub.f32 %v755, %v487
    %v772 = vsub.f32 %v756, %v489
    %v773 = vsub.f32 %v757, %v491
    %v774 = vsub.f32 %v758, %v493
    %v775 = vsub.f32 %v759, %v495
    %v776 = vsub.f32 %v760, %v497
    %v777 = vsub.f32 %v761, %v499
    %v778 = vsub.f32 %v762, %v501
    %v779 = vsub.f32 %v763, %v503
    %v780 = vsub.f32 %v764, %v505
    %v781 = vsub.f32 %v765, %v507
    %v782 = vsub.f32 %v766, %v509
    %v783 = vsub.f32 %v767, %v511
    %vm784 = vcmp.lt.s32.totalorder %v301, 16
    %vm785 = vcmp.lt.s32.totalorder %v302, 16
    %vm786 = vcmp.lt.s32.totalorder %v303, 16
    %vm787 = vcmp.lt.s32.totalorder %v304, 16
    %vm788 = vcmp.lt.s32.totalorder %v305, 16
    %vm789 = vcmp.lt.s32.totalorder %v306, 16
    %vm790 = vcmp.lt.s32.totalorder %v307, 16
    %vm791 = vcmp.lt.s32.totalorder %v308, 16
    %vm792 = vcmp.lt.s32.totalorder %v309, 16
    %vm793 = vcmp.lt.s32.totalorder %v310, 16
    %vm794 = vcmp.lt.s32.totalorder %v311, 16
    %vm795 = vcmp.lt.s32.totalorder %v312, 16
    %vm796 = vcmp.lt.s32.totalorder %v313, 16
    %vm797 = vcmp.lt.s32.totalorder %v314, 16
    %vm798 = vcmp.lt.s32.totalorder %v315, 16
    %vm799 = vcmp.lt.s32.totalorder %v316, 16
    %v800 = vsel %vm784, %v768, 0.0
    %v801 = vsel %vm785, %v769, 0.0
    %v802 = vsel %vm786, %v770, 0.0
    %v803 = vsel %vm787, %v771, 0.0
    %v804 = vsel %vm788, %v772, 0.0
    %v805 = vsel %vm789, %v773, 0.0
    %v806 = vsel %vm790, %v774, 0.0
    %v807 = vsel %vm791, %v775, 0.0
    %v808 = vsel %vm792, %v776, 0.0
    %v809 = vsel %vm793, %v777, 0.0
    %v810 = vsel %vm794, %v778, 0.0
    %v811 = vsel %vm795, %v779, 0.0
    %v812 = vsel %vm796, %v780, 0.0
    %v813 = vsel %vm797, %v781, 0.0
    %v814 = vsel %vm798, %v782, 0.0
    %v815 = vsel %vm799, %v783, 0.0
    %v832 = vlaneseq
    %v833 = vshrl.u32 %v832, 7
    %v834 = vsub.s32 %v382, %v833
    %v835 = vrot.slane %v800, %v834
    %v836 = vadd.s32 %v382, 4294967288
    %v837 = vlaneseq
    %v838 = vshrl.u32 %v837, 7
    %v839 = vsub.s32 %v836, %v838
    %v840 = vrot.slane %v801, %v839
    %vm841 = vcmask 130112
    %v842 = vsel %vm841, %v840, %v835
    %v843 = vadd.s32 %v382, 4294967280
    %v844 = vlaneseq
    %v845 = vshrl.u32 %v844, 7
    %v846 = vsub.s32 %v843, %v845
    %v847 = vrot.slane %v802, %v846
    %vm848 = vcmask 195712
    %v849 = vsel %vm848, %v847, %v842
    %v850 = vadd.s32 %v382, 4294967272
    %v851 = vlaneseq
    %v852 = vshrl.u32 %v851, 7
    %v853 = vsub.s32 %v850, %v852
    %v854 = vrot.slane %v803, %v853
    %vm855 = vcmask 261312
    %v856 = vsel %vm855, %v854, %v849
    %v857 = vadd.s32 %v382, 4294967264
    %v858 = vlaneseq
    %v859 = vshrl.u32 %v858, 7
    %v860 = vsub.s32 %v857, %v859
    %v861 = vrot.slane %v804, %v860
    %vm862 = vcmask 326912
    %v863 = vsel %vm862, %v861, %v856
    %v864 = vadd.s32 %v382, 4294967256
    %v865 = vlaneseq
    %v866 = vshrl.u32 %v865, 7
    %v867 = vsub.s32 %v864, %v866
    %v868 = vrot.slane %v805, %v867
    %vm869 = vcmask 392512
    %v870 = vsel %vm869, %v868, %v863
    %v871 = vadd.s32 %v382, 4294967248
    %v872 = vlaneseq
    %v873 = vshrl.u32 %v872, 7
    %v874 = vsub.s32 %v871, %v873
    %v875 = vrot.slane %v806, %v874
    %vm876 = vcmask 458112
    %v877 = vsel %vm876, %v875, %v870
    %v878 = vadd.s32 %v382, 4294967240
    %v879 = vlaneseq
    %v880 = vshrl.u32 %v879, 7
    %v881 = vsub.s32 %v878, %v880
    %v882 = vrot.slane %v807, %v881
    %vm883 = vcmask 523712
    %v884 = vsel %vm883, %v882, %v877
    %v885 = vadd.s32 %v382, 4294967232
    %v886 = vlaneseq
    %v887 = vshrl.u32 %v886, 7
    %v888 = vsub.s32 %v885, %v887
    %v889 = vrot.slane %v808, %v888
    %vm890 = vcmask 589312
    %v891 = vsel %vm890, %v889, %v884
    %v892 = vadd.s32 %v382, 4294967224
    %v893 = vlaneseq
    %v894 = vshrl.u32 %v893, 7
    %v895 = vsub.s32 %v892, %v894
    %v896 = vrot.slane %v809, %v895
    %vm897 = vcmask 654912
    %v898 = vsel %vm897, %v896, %v891
    %v899 = vadd.s32 %v382, 4294967216
    %v900 = vlaneseq
    %v901 = vshrl.u32 %v900, 7
    %v902 = vsub.s32 %v899, %v901
    %v903 = vrot.slane %v810, %v902
    %vm904 = vcmask 720512
    %v905 = vsel %vm904, %v903, %v898
    %v906 = vadd.s32 %v382, 4294967208
    %v907 = vlaneseq
    %v908 = vshrl.u32 %v907, 7
    %v909 = vsub.s32 %v906, %v908
    %v910 = vrot.slane %v811, %v909
    %vm911 = vcmask 786112
    %v912 = vsel %vm911, %v910, %v905
    %v913 = vadd.s32 %v382, 4294967200
    %v914 = vlaneseq
    %v915 = vshrl.u32 %v914, 7
    %v916 = vsub.s32 %v913, %v915
    %v917 = vrot.slane %v812, %v916
    %vm918 = vcmask 851712
    %v919 = vsel %vm918, %v917, %v912
    %v920 = vadd.s32 %v382, 4294967192
    %v921 = vlaneseq
    %v922 = vshrl.u32 %v921, 7
    %v923 = vsub.s32 %v920, %v922
    %v924 = vrot.slane %v813, %v923
    %vm925 = vcmask 917312
    %v926 = vsel %vm925, %v924, %v919
    %v927 = vadd.s32 %v382, 4294967184
    %v928 = vlaneseq
    %v929 = vshrl.u32 %v928, 7
    %v930 = vsub.s32 %v927, %v929
    %v931 = vrot.slane %v814, %v930
    %vm932 = vcmask 982912
    %v933 = vsel %vm932, %v931, %v926
    %v934 = vadd.s32 %v382, 4294967176
    %v935 = vlaneseq
    %v936 = vshrl.u32 %v935, 7
    %v937 = vsub.s32 %v934, %v936
    %v938 = vrot.slane %v815, %v937
    %vm939 = vcmask 1048512
    %v940 = vsel %vm939, %v938, %v933
    %942 = vst [vmem:[#allocation7] sm:$0x1] %v940
    // Predicated region
    $region18: #{tpu_custom_call.1} parent=1 // pred_check
      _
    $region19: #{tpu_custom_call.1} parent=1 // pred_check_branch
      %944 = sbr.rel (0) target = $region21
    $region20: #{tpu_custom_call.1} parent=1 // pred_region
      %s946 = ssub.s32 16, 16
      %947 = vsyncadd [#allocation4], %s946
      %s949 = sshll.u32 [#allocation7], 4
      %s950 = int_to_ptr.vmem [resolvable:$true] %s949
      %952 = dma.vmem_to_hbm [thread:$0]  %s950, 16, %s2, [#allocation4]
    $region21: #{tpu_custom_call.1} parent=1 // pred_fallthru
      _
    // Predicated region
    $region22: #{tpu_custom_call.1} parent=1 // pred_check
      _
    $region23: #{tpu_custom_call.1} parent=1 // pred_check_branch
      %954 = sbr.rel (0) target = $region25
    $region24: #{tpu_custom_call.1} parent=1 // pred_region
      %955 = dma.done [#allocation4], 16
    $region25: #{tpu_custom_call.1} parent=1 // pred_fallthru
      _
    %956 = vsyncpa [#allocation3], 1
    %957 = vsyncpa [#allocation6], 1
    %958 = vsyncpa [#allocation4], 1

</llo_original>
